<compile_context>
chip_gen: v7x
topology: tpu7x:2x2x1
jax: 0.10.0
libtpu: 0.0.40
codegen_flags: <defaults>
</compile_context>

<pallas_src>
import functools

import jax
import jax.numpy as jnp
from jax.experimental import pallas as pl
from jax.experimental.pallas import tpu as pltpu


def channel_attention_kernel(x_ref, w1t_ref, w2t_ref, o_ref, sum_ref, max_ref,
                             *, hw_actual, hw_tile, hw_is_padded):
    # x_ref:   (b_tile, C, hw_tile)   one spatial chunk of b_tile images
    # w1t_ref: (C, hidden)            fc1 weight, transposed
    # w2t_ref: (hidden, C)            fc2 weight, transposed
    # o_ref:   (b_tile, C)            lane-dense attention output
    # sum_ref/max_ref: (b_tile, C) f32 running accumulators (VMEM scratch)
    k = pl.program_id(1)

    @pl.when(k == 0)
    def _init():
        sum_ref[...] = jnp.zeros_like(sum_ref)
        max_ref[...] = jnp.full_like(max_ref, -jnp.inf)

    # Single load of the streamed tile; both reductions feed off it.
    x = x_ref[...].astype(jnp.float32)                       # (b_tile, C, hw_tile)

    if hw_is_padded:
        # Zero padding is exact for the sum; mask it out of the max.
        lane = jax.lax.broadcasted_iota(jnp.int32, x.shape, dimension=2)
        valid = (lane + k * hw_tile) < hw_actual
        x_for_max = jnp.where(valid, x, -jnp.inf)
    else:
        x_for_max = x

    sum_ref[...] += jnp.sum(x, axis=-1)                      # (b_tile, C)
    max_ref[...] = jnp.maximum(max_ref[...], jnp.max(x_for_max, axis=-1))

    @pl.when(k == pl.num_programs(1) - 1)
    def _finalize():
        avg = sum_ref[...] * jnp.float32(1.0 / hw_actual)    # (b_tile, C)
        mx = max_ref[...]                                    # (b_tile, C)
        w1t = w1t_ref[...].astype(jnp.float32)               # (C, hidden)
        w2t = w2t_ref[...].astype(jnp.float32)               # (hidden, C)

        # fc1 -> relu for both branches, then one fc2 on the sum (fc2 linear).
        h = (jnp.maximum(jnp.dot(avg, w1t, preferred_element_type=jnp.float32), 0.0)
             + jnp.maximum(jnp.dot(mx, w1t, preferred_element_type=jnp.float32), 0.0))
        y = jnp.dot(h, w2t, preferred_element_type=jnp.float32)   # (b_tile, C)
        o_ref[...] = jax.nn.sigmoid(y).astype(o_ref.dtype)


def channel_attention(x, w1, w2, *, b_tile=None, hw_tile=None,
                      vmem_budget_bytes=16 * 1024 * 1024):
    """x: (B, C, H, W); w1: (hidden, C, 1, 1); w2: (C, hidden, 1, 1). Returns (B, C, 1, 1)."""
    B, C, H, W = x.shape
    hidden = w1.shape[0]
    HW = H * W

    x2 = x.reshape(B, C, HW)
    w1t = w1.reshape(hidden, C).T                      # (C, hidden)
    w2t = w2.reshape(C, hidden).T                      # (hidden, C)

    # ---- batch tiling: amortize per-step overhead, keep >=2 parallel steps
    # when the batch is big enough (v7x megacore). ----
    if b_tile is None:
        b_tile = 8 if B > 8 else B
    B_pad = ((B + b_tile - 1) // b_tile) * b_tile

    # ---- spatial tiling: lane-multiples of 128, bounded by a VMEM budget for
    # the double-buffered x stream (safe on v5e/v6e/v7x scoped limits). ----
    HW_128 = ((HW + 127) // 128) * 128
    if hw_tile is None:
        bytes_per_lane = 2 * b_tile * C * x.dtype.itemsize   # double-buffered column
        max_lanes = max(128, (vmem_budget_bytes // max(bytes_per_lane, 1)) // 128 * 128)
        hw_tile = min(HW_128, max_lanes)
    n_hw = (HW_128 + hw_tile - 1) // hw_tile
    HW_pad = n_hw * hw_tile

    if B_pad != B or HW_pad != HW:
        x2 = jnp.pad(x2, ((0, B_pad - B), (0, 0), (0, HW_pad - HW)))

    kernel = functools.partial(
        channel_attention_kernel,
        hw_actual=HW, hw_tile=hw_tile, hw_is_padded=(HW_pad != HW))

    out = pl.pallas_call(
        kernel,
        out_shape=jax.ShapeDtypeStruct((B_pad, C), x.dtype),
        grid_spec=pltpu.PrefetchScalarGridSpec(
            num_scalar_prefetch=0,
            grid=(B_pad // b_tile, n_hw),
            in_specs=[
                pl.BlockSpec((b_tile, C, hw_tile), lambda b, k: (b, 0, k)),
                pl.BlockSpec((C, hidden), lambda b, k: (0, 0)),
                pl.BlockSpec((hidden, C), lambda b, k: (0, 0)),
            ],
            out_specs=pl.BlockSpec((b_tile, C), lambda b, k: (b, 0)),
            scratch_shapes=[
                pltpu.VMEM((b_tile, C), jnp.float32),   # running sum
                pltpu.VMEM((b_tile, C), jnp.float32),   # running max
            ],
        ),
        compiler_params=pltpu.CompilerParams(
            dimension_semantics=("parallel", "arbitrary"),
            vmem_limit_bytes=32 * 1024 * 1024,
        ),
    )(x2, w1t, w2t)

    return out[:B].reshape(B, C, 1, 1)


def channel_attention_ref(x, w1, w2):
    """Pure-JAX reference matching the PyTorch module."""
    B, C, H, W = x.shape
    hidden = w1.shape[0]
    w1m = w1.reshape(hidden, C)
    w2m = w2.reshape(C, hidden)
    avg = jnp.mean(x, axis=(2, 3))  # (B, C)
    mx = jnp.max(x, axis=(2, 3))    # (B, C)

    def branch(p):
        h = jnp.maximum(p @ w1m.T, 0.0)
        return h @ w2m.T

    return jax.nn.sigmoid(branch(avg) + branch(mx)).reshape(B, C, 1, 1)


if __name__ == "__main__":
    # in_planes must be divisible by ratio=16 -> C=32, hidden=2.
    B, C, H, W = 2, 32, 16, 16
    ratio = 16
    hidden = C // ratio

    key = jax.random.PRNGKey(0)
    kx, k1, k2 = jax.random.split(key, 3)
    x = jax.random.normal(kx, (B, C, H, W), dtype=jnp.float32)
    # PyTorch Conv2d weight layout (out, in, 1, 1).
    w1 = jax.random.normal(k1, (hidden, C, 1, 1), dtype=jnp.float32) * 0.1
    w2 = jax.random.normal(k2, (C, hidden, 1, 1), dtype=jnp.float32) * 0.1

    out = channel_attention(x, w1, w2)
    out = jax.block_until_ready(out)

    ref = channel_attention_ref(x, w1, w2)
    assert out.shape == (B, C, 1, 1)
    assert jnp.allclose(out, ref, atol=1e-5, rtol=1e-5), "mismatch vs reference"

    print("KERNEL_OK")
</pallas_src>

<mosaic_0001>
module attributes {stable_mosaic.version = 11 : i64} {
  func.func @channel_attention_kernel(%arg0: i32, %arg1: i32, %arg2: memref<2x32x256xf32, #tpu.memory_space<vmem>>, %arg3: memref<32x2xf32, #tpu.memory_space<vmem>>, %arg4: memref<2x32xf32, #tpu.memory_space<vmem>>, %arg5: memref<2x32xf32, #tpu.memory_space<vmem>>, %arg6: memref<2x32xf32, #tpu.memory_space<vmem>>, %arg7: memref<2x32xf32, #tpu.memory_space<vmem>>) attributes {dimension_semantics = [#tpu.dimension_semantics<parallel>, #tpu.dimension_semantics<arbitrary>], iteration_bounds = array<i64: 1, 1>, scalar_prefetch = 0 : i64, scratch_operands = 2 : i64, tpu.core_type = #tpu.core_type<tc>, window_params = [{transform_indices = @transform_0, window_bounds = array<i64: 2, 32, 256>}, {pipeline_mode = #tpu.pipeline_mode<synchronous>, transform_indices = @transform_1, window_bounds = array<i64: 32, 2>}, {pipeline_mode = #tpu.pipeline_mode<synchronous>, transform_indices = @transform_2, window_bounds = array<i64: 2, 32>}, {transform_indices = @transform_3, window_bounds = array<i64: 2, 32>}]} {
    %c0_i32 = arith.constant 0 : i32
    %0 = arith.cmpi eq, %arg1, %c0_i32 : i32
    %1 = arith.extui %0 : i1 to i32
    %c0_i32_0 = arith.constant 0 : i32
    %2 = arith.cmpi ne, %1, %c0_i32_0 : i32
    scf.if %2 {
      %cst_14 = arith.constant 0.000000e+00 : f32
      %15 = vector.broadcast %cst_14 : f32 to vector<2x32xf32>
      %c0_15 = arith.constant 0 : index
      %c0_16 = arith.constant 0 : index
      %16 = vector.load %arg6[%c0_15, %c0_16] : memref<2x32xf32, #tpu.memory_space<vmem>>, vector<2x32xf32>
      tpu.vector_store %arg6[%c0_15, %c0_16], %15 {strides = array<i32>} : memref<2x32xf32, #tpu.memory_space<vmem>>, vector<2x32xf32>,
      %cst_17 = arith.constant 0xFF800000 : f32
      %17 = vector.broadcast %cst_17 : f32 to vector<2x32xf32>
      %c0_18 = arith.constant 0 : index
      %c0_19 = arith.constant 0 : index
      %18 = vector.load %arg7[%c0_18, %c0_19] : memref<2x32xf32, #tpu.memory_space<vmem>>, vector<2x32xf32>
      tpu.vector_store %arg7[%c0_18, %c0_19], %17 {strides = array<i32>} : memref<2x32xf32, #tpu.memory_space<vmem>>, vector<2x32xf32>,
    } else {
    }
    %c0 = arith.constant 0 : index
    %c0_1 = arith.constant 0 : index
    %c0_2 = arith.constant 0 : index
    %3 = vector.load %arg2[%c0, %c0_1, %c0_2] : memref<2x32x256xf32, #tpu.memory_space<vmem>>, vector<2x32x256xf32>
    %c0_3 = arith.constant 0 : index
    %c0_4 = arith.constant 0 : index
    %4 = vector.load %arg6[%c0_3, %c0_4] : memref<2x32xf32, #tpu.memory_space<vmem>>, vector<2x32xf32>
    %cst = arith.constant dense<0.000000e+00> : vector<2x32xf32>
    %5 = vector.multi_reduction <add>, %3, %cst [2] : vector<2x32x256xf32> to vector<2x32xf32>
    %6 = arith.addf %4, %5 : vector<2x32xf32>
    %c0_5 = arith.constant 0 : index
    %c0_6 = arith.constant 0 : index
    %7 = vector.load %arg6[%c0_5, %c0_6] : memref<2x32xf32, #tpu.memory_space<vmem>>, vector<2x32xf32>
    tpu.vector_store %arg6[%c0_5, %c0_6], %6 {strides = array<i32>} : memref<2x32xf32, #tpu.memory_space<vmem>>, vector<2x32xf32>,
    %c0_7 = arith.constant 0 : index
    %c0_8 = arith.constant 0 : index
    %8 = vector.load %arg7[%c0_7, %c0_8] : memref<2x32xf32, #tpu.memory_space<vmem>>, vector<2x32xf32>
    %cst_9 = arith.constant dense<0xFF800000> : vector<2x32xf32>
    %9 = vector.multi_reduction <maximumf>, %3, %cst_9 [2] : vector<2x32x256xf32> to vector<2x32xf32>
    %10 = arith.maximumf %8, %9 : vector<2x32xf32>
    %c0_10 = arith.constant 0 : index
    %c0_11 = arith.constant 0 : index
    %11 = vector.load %arg7[%c0_10, %c0_11] : memref<2x32xf32, #tpu.memory_space<vmem>>, vector<2x32xf32>
    tpu.vector_store %arg7[%c0_10, %c0_11], %10 {strides = array<i32>} : memref<2x32xf32, #tpu.memory_space<vmem>>, vector<2x32xf32>,
    %c0_i32_12 = arith.constant 0 : i32
    %12 = arith.cmpi eq, %arg1, %c0_i32_12 : i32
    %13 = arith.extui %12 : i1 to i32
    %c0_i32_13 = arith.constant 0 : i32
    %14 = arith.cmpi ne, %13, %c0_i32_13 : i32
    scf.if %14 {
      %c0_14 = arith.constant 0 : index
      %c0_15 = arith.constant 0 : index
      %15 = vector.load %arg6[%c0_14, %c0_15] : memref<2x32xf32, #tpu.memory_space<vmem>>, vector<2x32xf32>
      %cst_16 = arith.constant 3.906250e-03 : f32
      %16 = vector.broadcast %cst_16 : f32 to vector<2x32xf32>
      %17 = arith.mulf %15, %16 : vector<2x32xf32>
      %c0_17 = arith.constant 0 : index
      %c0_18 = arith.constant 0 : index
      %18 = vector.load %arg7[%c0_17, %c0_18] : memref<2x32xf32, #tpu.memory_space<vmem>>, vector<2x32xf32>
      %c0_19 = arith.constant 0 : index
      %c0_20 = arith.constant 0 : index
      %19 = vector.load %arg3[%c0_19, %c0_20] : memref<32x2xf32, #tpu.memory_space<vmem>>, vector<32x2xf32>
      %c0_21 = arith.constant 0 : index
      %c0_22 = arith.constant 0 : index
      %20 = vector.load %arg4[%c0_21, %c0_22] : memref<2x32xf32, #tpu.memory_space<vmem>>, vector<2x32xf32>
      %cst_23 = arith.constant dense<0.000000e+00> : vector<2x2xf32>
      %21 = tpu.matmul %17, %19, %cst_23 {dimension_numbers = #tpu.dot_dimension_numbers<[1], [0], [0], [1], [0, 0, 1, 1], [], []>} : vector<2x32xf32>, vector<32x2xf32>, vector<2x2xf32> -> vector<2x2xf32>
      %cst_24 = arith.constant 0.000000e+00 : f32
      %22 = vector.broadcast %cst_24 : f32 to vector<2x2xf32>
      %23 = arith.maximumf %21, %22 : vector<2x2xf32>
      %cst_25 = arith.constant dense<0.000000e+00> : vector<2x2xf32>
      %24 = tpu.matmul %18, %19, %cst_25 {dimension_numbers = #tpu.dot_dimension_numbers<[1], [0], [0], [1], [0, 0, 1, 1], [], []>} : vector<2x32xf32>, vector<32x2xf32>, vector<2x2xf32> -> vector<2x2xf32>
      %cst_26 = arith.constant 0.000000e+00 : f32
      %25 = vector.broadcast %cst_26 : f32 to vector<2x2xf32>
      %26 = arith.maximumf %24, %25 : vector<2x2xf32>
      %27 = arith.addf %23, %26 : vector<2x2xf32>
      %cst_27 = arith.constant dense<0.000000e+00> : vector<2x32xf32>
      %28 = tpu.matmul %27, %20, %cst_27 {dimension_numbers = #tpu.dot_dimension_numbers<[1], [0], [0], [1], [0, 0, 1, 1], [], []>} : vector<2x2xf32>, vector<2x32xf32>, vector<2x32xf32> -> vector<2x32xf32>
      %29 = arith.negf %28 : vector<2x32xf32>
      %30 = math.exp %29 : vector<2x32xf32>
      %cst_28 = arith.constant 1.000000e+00 : f32
      %31 = vector.broadcast %cst_28 : f32 to vector<2x32xf32>
      %32 = arith.addf %31, %30 : vector<2x32xf32>
      %33 = arith.divf %31, %32 : vector<2x32xf32>
      %c0_29 = arith.constant 0 : index
      %c0_30 = arith.constant 0 : index
      %34 = vector.load %arg5[%c0_29, %c0_30] : memref<2x32xf32, #tpu.memory_space<vmem>>, vector<2x32xf32>
      tpu.vector_store %arg5[%c0_29, %c0_30], %33 {strides = array<i32>} : memref<2x32xf32, #tpu.memory_space<vmem>>, vector<2x32xf32>,
    } else {
    }
    return
  }
  func.func @transform_0(%arg0: i32, %arg1: i32) -> (i32, i32, i32) {
    %c0_i32 = arith.constant 0 : i32
    %c0_i32_0 = arith.constant 0 : i32
    return %arg0, %c0_i32, %arg1 : i32, i32, i32
  }
  func.func @transform_1(%arg0: i32, %arg1: i32) -> (i32, i32) {
    %c0_i32 = arith.constant 0 : i32
    %c0_i32_0 = arith.constant 0 : i32
    %c0_i32_1 = arith.constant 0 : i32
    return %c0_i32, %c0_i32_0 : i32, i32
  }
  func.func @transform_2(%arg0: i32, %arg1: i32) -> (i32, i32) {
    %c0_i32 = arith.constant 0 : i32
    %c0_i32_0 = arith.constant 0 : i32
    %c0_i32_1 = arith.constant 0 : i32
    return %c0_i32, %c0_i32_0 : i32, i32
  }
  func.func @transform_3(%arg0: i32, %arg1: i32) -> (i32, i32) {
    %c0_i32 = arith.constant 0 : i32
    %c0_i32_0 = arith.constant 0 : i32
    return %arg0, %c0_i32 : i32, i32
  }
}

</mosaic_0001>

<llo_original>
// kernel: tpu_custom_call.1
$region0: #{tpu_custom_call.1}
  #allocation0 [shape = 'u32[]', space=smem, size = 0x4, offset = 0x4, fixed_abs, tag = 'smem constant byte address 0x4 - core index']
  #allocation1 [shape = 'u32[144,128]{1,0:T(1,128)}', space=vmem, size = 0x12000, scoped, tag = 'internal scratch']
  #allocation2 [shape = 'f32[2,32]{1,0:T(2,128)}', space=vmem, size = 0x400, scoped, tag = 'scratch operand']
  #allocation3 [shape = 'f32[2,32]{1,0:T(2,128)}', space=vmem, size = 0x400, scoped, tag = 'scratch operand']
  %s0 = inlined_call_operand.hbm [shape: f32[2,32,256], index: 0, kind: input, shape index: {}]
  %s1 = inlined_call_operand.vmem [shape: f32[32,2], index: 1, kind: input, shape index: {}]
  %s2 = inlined_call_operand.vmem [shape: f32[2,32], index: 2, kind: input, shape index: {}]
  %s3 = inlined_call_operand.hbm [shape: f32[2,32], index: 3, kind: output, shape index: {}]
  %s4 = sld [smem:[#allocation0]]
  $region34: #{tpu_custom_call.1} parent=0
    _
  %s6 = ssub.s32 1, %s4
  %s7 = scalar_select 0, %s6, %s4
  $region1: #{tpu_custom_call.1} parent=0
    #allocation4 [shape = 'u8[65536]{0}', space=vmem, size = 0x10000, scoped, tag = 'input window, operand 0, single buffered']
    #allocation5 [shape = 's32[1]{0}', space=sflag, size = 0x4, scoped, tag = 'scoped memory for tpu_custom_call.1']
    #allocation6 [shape = 's32[1]{0}', space=sflag, size = 0x4, scoped, tag = 'scoped memory for tpu_custom_call.1']
    #allocation7 [shape = 'u8[1024]{0}', space=vmem, size = 0x400, scoped, tag = 'output window, operand 0, single buffered']
    %8 = vsyncpa [#allocation5], 0
    %9 = vsyncpa [#allocation6], 0
    // Predicated region
    $region2: #{tpu_custom_call.1} parent=1 // pred_check
      _
    $region3: #{tpu_custom_call.1} parent=1 // pred_check_branch
      %11 = sbr.rel (0) target = $region5
    $region4: #{tpu_custom_call.1} parent=1 // pred_region
      %s13 = ssub.s32 2048, 2048
      %14 = vsyncadd [#allocation5], %s13
      %s15 = sshll.u32 [#allocation4], 4
      %s16 = int_to_ptr.vmem [resolvable:$true] %s15
      %21 = dma.hbm_to_vmem [thread:$0]  %s0, 2048, %s16, [#allocation5], 256, 256, 16
    $region5: #{tpu_custom_call.1} parent=1 // pred_fallthru
      _
    // Predicated region
    $region6: #{tpu_custom_call.1} parent=1 // pred_check
      _
    $region7: #{tpu_custom_call.1} parent=1 // pred_check_branch
      %23 = sbr.rel (0) target = $region9
    $region8: #{tpu_custom_call.1} parent=1 // pred_region
      _
    $region9: #{tpu_custom_call.1} parent=1 // pred_fallthru
      _
    // Predicated region
    $region10: #{tpu_custom_call.1} parent=1 // pred_check
      _
    $region11: #{tpu_custom_call.1} parent=1 // pred_check_branch
      %25 = sbr.rel (0) target = $region13
    $region12: #{tpu_custom_call.1} parent=1 // pred_region
      _
    $region13: #{tpu_custom_call.1} parent=1 // pred_fallthru
      _
    // Predicated region
    $region14: #{tpu_custom_call.1} parent=1 // pred_check
      _
    $region15: #{tpu_custom_call.1} parent=1 // pred_check_branch
      %27 = sbr.rel (0) target = $region17
    $region16: #{tpu_custom_call.1} parent=1 // pred_region
      %28 = dma.done [#allocation5], 2048
    $region17: #{tpu_custom_call.1} parent=1 // pred_fallthru
      _
    %p29 = scmp.eq.s32.totalorder 0, 0
    // Predicated region
    $region18: #{tpu_custom_call.1} parent=1 // pred_check
      %p30 = pneg %p29
    $region19: #{tpu_custom_call.1} parent=1 // pred_check_branch
      %32 = sbr.rel (%p30) target = $region21
    $region20: #{tpu_custom_call.1} parent=1 // pred_region
      %vm33 = vcmask 254976
      %34 = vst.msk [vmem:[#allocation2] sm:$0x3] %vm33, 0.0
      %35 = vst.msk [vmem:[#allocation3] sm:$0x3] %vm33, -inf
    $region21: #{tpu_custom_call.1} parent=1 // pred_fallthru
      _
    %v36 = vld [vmem:[#allocation4] sm:$0xff]
    %v37 = vld [vmem:[#allocation4 + $0x8] sm:$0xff]
    %v38 = vld [vmem:[#allocation4 + $0x10] sm:$0xff]
    %v39 = vld [vmem:[#allocation4 + $0x18] sm:$0xff]
    %v40 = vld [vmem:[#allocation4 + $0x20] sm:$0xff]
    %v41 = vld [vmem:[#allocation4 + $0x28] sm:$0xff]
    %v42 = vld [vmem:[#allocation4 + $0x30] sm:$0xff]
    %v43 = vld [vmem:[#allocation4 + $0x38] sm:$0xff]
    %v44 = vld [vmem:[#allocation4 + $0x40] sm:$0xff]
    %v45 = vld [vmem:[#allocation4 + $0x48] sm:$0xff]
    %v46 = vld [vmem:[#allocation4 + $0x50] sm:$0xff]
    %v47 = vld [vmem:[#allocation4 + $0x58] sm:$0xff]
    %v48 = vld [vmem:[#allocation4 + $0x60] sm:$0xff]
    %v49 = vld [vmem:[#allocation4 + $0x68] sm:$0xff]
    %v50 = vld [vmem:[#allocation4 + $0x70] sm:$0xff]
    %v51 = vld [vmem:[#allocation4 + $0x78] sm:$0xff]
    %v52 = vld [vmem:[#allocation2] sm:$0x3]
    %v53 = vadd.f32 %v36, %v37
    %54 = vadd.xlane.f32.xlu0 %v53
    %v55 = vpop.xlane.xlu0 %54
    %v56 = vadd.f32 %v38, %v39
    %57 = vadd.xlane.f32.xlu0 %v56
    %v58 = vpop.xlane.xlu0 %57
    %v59 = vadd.f32 %v40, %v41
    %60 = vadd.xlane.f32.xlu0 %v59
    %v61 = vpop.xlane.xlu0 %60
    %v62 = vadd.f32 %v42, %v43
    %63 = vadd.xlane.f32.xlu0 %v62
    %v64 = vpop.xlane.xlu0 %63
    %v65 = vadd.f32 %v44, %v45
    %66 = vadd.xlane.f32.xlu0 %v65
    %v67 = vpop.xlane.xlu0 %66
    %v68 = vadd.f32 %v46, %v47
    %69 = vadd.xlane.f32.xlu0 %v68
    %v70 = vpop.xlane.xlu0 %69
    %v71 = vadd.f32 %v48, %v49
    %72 = vadd.xlane.f32.xlu0 %v71
    %v73 = vpop.xlane.xlu0 %72
    %v74 = vadd.f32 %v50, %v51
    %75 = vadd.xlane.f32.xlu0 %v74
    %v76 = vpop.xlane.xlu0 %75
    %v85 = vlaneseq
    %v86 = vand.u32 %v85, 127
    %v87 = vlaneseq
    %v88 = vshrl.u32 %v87, 7
    %v89 = vsub.s32 %v86, %v88
    %v90 = vrot.slane %v55, %v89
    %v91 = vadd.s32 %v86, 4294967288
    %v92 = vlaneseq
    %v93 = vshrl.u32 %v92, 7
    %v94 = vsub.s32 %v91, %v93
    %v95 = vrot.slane %v58, %v94
    %vm96 = vcmask 130112
    %v97 = vsel %vm96, %v95, %v90
    %v98 = vadd.s32 %v86, 4294967280
    %v99 = vlaneseq
    %v100 = vshrl.u32 %v99, 7
    %v101 = vsub.s32 %v98, %v100
    %v102 = vrot.slane %v61, %v101
    %vm103 = vcmask 195712
    %v104 = vsel %vm103, %v102, %v97
    %v105 = vadd.s32 %v86, 4294967272
    %v106 = vlaneseq
    %v107 = vshrl.u32 %v106, 7
    %v108 = vsub.s32 %v105, %v107
    %v109 = vrot.slane %v64, %v108
    %vm110 = vcmask 261312
    %v111 = vsel %vm110, %v109, %v104
    %v112 = vlaneseq
    %v113 = vshrl.u32 %v112, 7
    %v114 = vsub.s32 %v86, %v113
    %v115 = vrot.slane %v67, %v114
    %v116 = vlaneseq
    %v117 = vshrl.u32 %v116, 7
    %v118 = vsub.s32 %v91, %v117
    %v119 = vrot.slane %v70, %v118
    %v120 = vsel %vm96, %v119, %v115
    %v121 = vlaneseq
    %v122 = vshrl.u32 %v121, 7
    %v123 = vsub.s32 %v98, %v122
    %v124 = vrot.slane %v73, %v123
    %v125 = vsel %vm103, %v124, %v120
    %v126 = vlaneseq
    %v127 = vshrl.u32 %v126, 7
    %v128 = vsub.s32 %v105, %v127
    %v129 = vrot.slane %v76, %v128
    %v130 = vsel %vm110, %v129, %v125
    %vm131 = vcmask 1041409
    %v132 = vsel %vm131, %v130, %v111
    %v134 = vadd.f32 %v52, %v132
    %vm135 = vcmask 254976
    %136 = vst.msk [vmem:[#allocation2] sm:$0x3] %vm135, %v134
    %v137 = vld [vmem:[#allocation3] sm:$0x3]
    %v138 = vmax.f32 %v36, %v37
    %139 = vmax.xlane.f32.xlu0 %v138
    %v140 = vpop.xlane.xlu0 %139
    %v141 = vmax.f32 %v38, %v39
    %142 = vmax.xlane.f32.xlu0 %v141
    %v143 = vpop.xlane.xlu0 %142
    %v144 = vmax.f32 %v40, %v41
    %145 = vmax.xlane.f32.xlu0 %v144
    %v146 = vpop.xlane.xlu0 %145
    %v147 = vmax.f32 %v42, %v43
    %148 = vmax.xlane.f32.xlu0 %v147
    %v149 = vpop.xlane.xlu0 %148
    %v150 = vmax.f32 %v44, %v45
    %151 = vmax.xlane.f32.xlu0 %v150
    %v152 = vpop.xlane.xlu0 %151
    %v153 = vmax.f32 %v46, %v47
    %154 = vmax.xlane.f32.xlu0 %v153
    %v155 = vpop.xlane.xlu0 %154
    %v156 = vmax.f32 %v48, %v49
    %157 = vmax.xlane.f32.xlu0 %v156
    %v158 = vpop.xlane.xlu0 %157
    %v159 = vmax.f32 %v50, %v51
    %160 = vmax.xlane.f32.xlu0 %v159
    %v161 = vpop.xlane.xlu0 %160
    %v170 = vlaneseq
    %v171 = vshrl.u32 %v170, 7
    %v172 = vsub.s32 %v86, %v171
    %v173 = vrot.slane %v140, %v172
    %v174 = vlaneseq
    %v175 = vshrl.u32 %v174, 7
    %v176 = vsub.s32 %v91, %v175
    %v177 = vrot.slane %v143, %v176
    %v178 = vsel %vm96, %v177, %v173
    %v179 = vlaneseq
    %v180 = vshrl.u32 %v179, 7
    %v181 = vsub.s32 %v98, %v180
    %v182 = vrot.slane %v146, %v181
    %v183 = vsel %vm103, %v182, %v178
    %v184 = vlaneseq
    %v185 = vshrl.u32 %v184, 7
    %v186 = vsub.s32 %v105, %v185
    %v187 = vrot.slane %v149, %v186
    %v188 = vsel %vm110, %v187, %v183
    %v189 = vlaneseq
    %v190 = vshrl.u32 %v189, 7
    %v191 = vsub.s32 %v86, %v190
    %v192 = vrot.slane %v152, %v191
    %v193 = vlaneseq
    %v194 = vshrl.u32 %v193, 7
    %v195 = vsub.s32 %v91, %v194
    %v196 = vrot.slane %v155, %v195
    %v197 = vsel %vm96, %v196, %v192
    %v198 = vlaneseq
    %v199 = vshrl.u32 %v198, 7
    %v200 = vsub.s32 %v98, %v199
    %v201 = vrot.slane %v158, %v200
    %v202 = vsel %vm103, %v201, %v197
    %v203 = vlaneseq
    %v204 = vshrl.u32 %v203, 7
    %v205 = vsub.s32 %v105, %v204
    %v206 = vrot.slane %v161, %v205
    %v207 = vsel %vm110, %v206, %v202
    %v208 = vsel %vm131, %v207, %v188
    %v210 = vmax.f32 %v137, %v208
    %211 = vst.msk [vmem:[#allocation3] sm:$0x3] %vm135, %v210
    // Predicated region
    $region22: #{tpu_custom_call.1} parent=1 // pred_check
      %p212 = pneg %p29
    $region23: #{tpu_custom_call.1} parent=1 // pred_check_branch
      %214 = sbr.rel (%p212) target = $region25
    $region24: #{tpu_custom_call.1} parent=1 // pred_region
      %v215 = vld [vmem:[#allocation2] sm:$0x3]
      %v216 = vmul.f32 %v215, 0.00390625
      %v217 = vld [vmem:[#allocation3] sm:$0x3]
      %v218 = vld [vmem:[%s1] sm:$0xff]
      %v219 = vld [vmem:[%s1 + $0x8] sm:$0xff]
      %v220 = vld [vmem:[%s1 + $0x10] sm:$0xff]
      %v221 = vld [vmem:[%s1 + $0x18] sm:$0xff]
      %v222 = vld [vmem:[%s2] sm:$0x3]
      %vm223 = vcmask 261120
      %v225 = vsel %vm223, %v216, 0
      %227 = vmatprep.subr.mxu0 0.0
      %228 = vmatpush1.msra.mxu0 %v218
      %229 = vmatprep.subr.mxu0 0.0
      %230 = vmatpush1.msra.mxu0 %v219
      %231 = vmatprep.subr.mxu0 0.0
      %232 = vmatpush1.msra.mxu0 %v220
      %233 = vmatprep.subr.mxu0 0.0
      %234 = vmatpush1.msra.mxu0 %v221
      %235 = vmatprep.subr.mxu0 0.0
      %236 = vmatpush1.msra.mxu0 0.0
      %237 = vmatprep.subr.mxu0 0.0
      %238 = vmatpush1.msra.mxu0 0.0
      %239 = vmatprep.subr.mxu0 0.0
      %240 = vmatpush1.msra.mxu0 0.0
      %241 = vmatprep.subr.mxu0 0.0
      %242 = vmatpush1.msra.mxu0 0.0
      %243 = vmatprep.subr.mxu0 0.0
      %244 = vmatpush1.msra.mxu0 0.0
      %245 = vmatprep.subr.mxu0 0.0
      %246 = vmatpush1.msra.mxu0 0.0
      %247 = vmatprep.subr.mxu0 0.0
      %248 = vmatpush1.msra.mxu0 0.0
      %249 = vmatprep.subr.mxu0 0.0
      %250 = vmatpush1.msra.mxu0 0.0
      %251 = vmatprep.subr.mxu0 0.0
      %252 = vmatpush1.msra.mxu0 0.0
      %253 = vmatprep.subr.mxu0 0.0
      %254 = vmatpush1.msra.mxu0 0.0
      %255 = vmatprep.subr.mxu0 0.0
      %256 = vmatpush1.msra.mxu0 0.0
      %257 = vmatprep.subr.mxu0 0.0
      %258 = vmatpush1.msra.mxu0 0.0
      %259 = vmatprep.subr.mxu0 0.0
      %260 = vmatpush1.msra.mxu0 0.0
      %261 = vmatprep.subr.mxu0 0.0
      %262 = vmatpush1.msra.mxu0 0.0
      %263 = vmatprep.subr.mxu0 0.0
      %264 = vmatpush1.msra.mxu0 0.0
      %265 = vmatprep.subr.mxu0 0.0
      %266 = vmatpush1.msra.mxu0 0.0
      %267 = vmatprep.subr.mxu0 0.0
      %268 = vmatpush1.msra.mxu0 0.0
      %269 = vmatprep.subr.mxu0 0.0
      %270 = vmatpush1.msra.mxu0 0.0
      %271 = vmatprep.subr.mxu0 0.0
      %272 = vmatpush1.msra.mxu0 0.0
      %273 = vmatprep.subr.mxu0 0.0
      %274 = vmatpush1.msra.mxu0 0.0
      %275 = vmatprep.subr.mxu0 0.0
      %276 = vmatpush1.msra.mxu0 0.0
      %277 = vmatprep.subr.mxu0 0.0
      %278 = vmatpush1.msra.mxu0 0.0
      %279 = vmatprep.subr.mxu0 0.0
      %280 = vmatpush1.msra.mxu0 0.0
      %281 = vmatprep.subr.mxu0 0.0
      %282 = vmatpush1.msra.mxu0 0.0
      %283 = vmatprep.subr.mxu0 0.0
      %284 = vmatpush1.msra.mxu0 0.0
      %285 = vmatprep.subr.mxu0 0.0
      %286 = vmatpush1.msra.mxu0 0.0
      %287 = vmatprep.subr.mxu0 0.0
      %288 = vmatpush1.msra.mxu0 0.0
      %289 = vmatprep.subr.mxu0 0.0
      %290 = vmatpush1.msra.mxu0 0.0
      %291 = vmatprep.mubr.f32.mxu0 0.0
      %292 = vmatmul.mubr.f32.gmra.mrb[0].mxu0 %v225
      %v293 = vpop.f32.mrb[0].mxu0
      %v294 = vadd.f32 0.0, %v293
      %v295 = vpop.f32.mrb[0].mxu0
      %296 = vdwg.mxu0
      %v297 = vmax.f32 %v294, 0.0
      %v299 = vsel %vm223, %v217, 0
      %301 = vmatprep.subr.mxu0 0.0
      %302 = vmatpush1.msra.mxu0 %v218
      %303 = vmatprep.subr.mxu0 0.0
      %304 = vmatpush1.msra.mxu0 %v219
      %305 = vmatprep.subr.mxu0 0.0
      %306 = vmatpush1.msra.mxu0 %v220
      %307 = vmatprep.subr.mxu0 0.0
      %308 = vmatpush1.msra.mxu0 %v221
      %309 = vmatprep.subr.mxu0 0.0
      %310 = vmatpush1.msra.mxu0 0.0
      %311 = vmatprep.subr.mxu0 0.0
      %312 = vmatpush1.msra.mxu0 0.0
      %313 = vmatprep.subr.mxu0 0.0
      %314 = vmatpush1.msra.mxu0 0.0
      %315 = vmatprep.subr.mxu0 0.0
      %316 = vmatpush1.msra.mxu0 0.0
      %317 = vmatprep.subr.mxu0 0.0
      %318 = vmatpush1.msra.mxu0 0.0
      %319 = vmatprep.subr.mxu0 0.0
      %320 = vmatpush1.msra.mxu0 0.0
      %321 = vmatprep.subr.mxu0 0.0
      %322 = vmatpush1.msra.mxu0 0.0
      %323 = vmatprep.subr.mxu0 0.0
      %324 = vmatpush1.msra.mxu0 0.0
      %325 = vmatprep.subr.mxu0 0.0
      %326 = vmatpush1.msra.mxu0 0.0
      %327 = vmatprep.subr.mxu0 0.0
      %328 = vmatpush1.msra.mxu0 0.0
      %329 = vmatprep.subr.mxu0 0.0
      %330 = vmatpush1.msra.mxu0 0.0
      %331 = vmatprep.subr.mxu0 0.0
      %332 = vmatpush1.msra.mxu0 0.0
      %333 = vmatprep.subr.mxu0 0.0
      %334 = vmatpush1.msra.mxu0 0.0
      %335 = vmatprep.subr.mxu0 0.0
      %336 = vmatpush1.msra.mxu0 0.0
      %337 = vmatprep.subr.mxu0 0.0
      %338 = vmatpush1.msra.mxu0 0.0
      %339 = vmatprep.subr.mxu0 0.0
      %340 = vmatpush1.msra.mxu0 0.0
      %341 = vmatprep.subr.mxu0 0.0
      %342 = vmatpush1.msra.mxu0 0.0
      %343 = vmatprep.subr.mxu0 0.0
      %344 = vmatpush1.msra.mxu0 0.0
      %345 = vmatprep.subr.mxu0 0.0
      %346 = vmatpush1.msra.mxu0 0.0
      %347 = vmatprep.subr.mxu0 0.0
      %348 = vmatpush1.msra.mxu0 0.0
      %349 = vmatprep.subr.mxu0 0.0
      %350 = vmatpush1.msra.mxu0 0.0
      %351 = vmatprep.subr.mxu0 0.0
      %352 = vmatpush1.msra.mxu0 0.0
      %353 = vmatprep.subr.mxu0 0.0
      %354 = vmatpush1.msra.mxu0 0.0
      %355 = vmatprep.subr.mxu0 0.0
      %356 = vmatpush1.msra.mxu0 0.0
      %357 = vmatprep.subr.mxu0 0.0
      %358 = vmatpush1.msra.mxu0 0.0
      %359 = vmatprep.subr.mxu0 0.0
      %360 = vmatpush1.msra.mxu0 0.0
      %361 = vmatprep.subr.mxu0 0.0
      %362 = vmatpush1.msra.mxu0 0.0
      %363 = vmatprep.subr.mxu0 0.0
      %364 = vmatpush1.msra.mxu0 0.0
      %365 = vmatprep.mubr.f32.mxu0 0.0
      %366 = vmatmul.mubr.f32.gmra.mrb[0].mxu0 %v299
      %v367 = vpop.f32.mrb[0].mxu0
      %v368 = vadd.f32 0.0, %v367
      %v369 = vpop.f32.mrb[0].mxu0
      %370 = vdwg.mxu0
      %v371 = vmax.f32 %v368, 0.0
      %v372 = vadd.f32 %v297, %v371
      %vm373 = vcmask 15360
      %v375 = vsel %vm373, %v372, 0
      %vm377 = vcmask 1041408
      %v379 = vsel %vm377, %v222, 0
      %381 = vmatprep.subr.mxu0 0.0
      %382 = vmatpush1.msra.mxu0 %v379
      %383 = vmatprep.subr.mxu0 0.0
      %384 = vmatpush1.msra.mxu0 0.0
      %385 = vmatprep.subr.mxu0 0.0
      %386 = vmatpush1.msra.mxu0 0.0
      %387 = vmatprep.subr.mxu0 0.0
      %388 = vmatpush1.msra.mxu0 0.0
      %389 = vmatprep.subr.mxu0 0.0
      %390 = vmatpush1.msra.mxu0 0.0
      %391 = vmatprep.subr.mxu0 0.0
      %392 = vmatpush1.msra.mxu0 0.0
      %393 = vmatprep.subr.mxu0 0.0
      %394 = vmatpush1.msra.mxu0 0.0
      %395 = vmatprep.subr.mxu0 0.0
      %396 = vmatpush1.msra.mxu0 0.0
      %397 = vmatprep.subr.mxu0 0.0
      %398 = vmatpush1.msra.mxu0 0.0
      %399 = vmatprep.subr.mxu0 0.0
      %400 = vmatpush1.msra.mxu0 0.0
      %401 = vmatprep.subr.mxu0 0.0
      %402 = vmatpush1.msra.mxu0 0.0
      %403 = vmatprep.subr.mxu0 0.0
      %404 = vmatpush1.msra.mxu0 0.0
      %405 = vmatprep.subr.mxu0 0.0
      %406 = vmatpush1.msra.mxu0 0.0
      %407 = vmatprep.subr.mxu0 0.0
      %408 = vmatpush1.msra.mxu0 0.0
      %409 = vmatprep.subr.mxu0 0.0
      %410 = vmatpush1.msra.mxu0 0.0
      %411 = vmatprep.subr.mxu0 0.0
      %412 = vmatpush1.msra.mxu0 0.0
      %413 = vmatprep.subr.mxu0 0.0
      %414 = vmatpush1.msra.mxu0 0.0
      %415 = vmatprep.subr.mxu0 0.0
      %416 = vmatpush1.msra.mxu0 0.0
      %417 = vmatprep.subr.mxu0 0.0
      %418 = vmatpush1.msra.mxu0 0.0
      %419 = vmatprep.subr.mxu0 0.0
      %420 = vmatpush1.msra.mxu0 0.0
      %421 = vmatprep.subr.mxu0 0.0
      %422 = vmatpush1.msra.mxu0 0.0
      %423 = vmatprep.subr.mxu0 0.0
      %424 = vmatpush1.msra.mxu0 0.0
      %425 = vmatprep.subr.mxu0 0.0
      %426 = vmatpush1.msra.mxu0 0.0
      %427 = vmatprep.subr.mxu0 0.0
      %428 = vmatpush1.msra.mxu0 0.0
      %429 = vmatprep.subr.mxu0 0.0
      %430 = vmatpush1.msra.mxu0 0.0
      %431 = vmatprep.subr.mxu0 0.0
      %432 = vmatpush1.msra.mxu0 0.0
      %433 = vmatprep.subr.mxu0 0.0
      %434 = vmatpush1.msra.mxu0 0.0
      %435 = vmatprep.subr.mxu0 0.0
      %436 = vmatpush1.msra.mxu0 0.0
      %437 = vmatprep.subr.mxu0 0.0
      %438 = vmatpush1.msra.mxu0 0.0
      %439 = vmatprep.subr.mxu0 0.0
      %440 = vmatpush1.msra.mxu0 0.0
      %441 = vmatprep.subr.mxu0 0.0
      %442 = vmatpush1.msra.mxu0 0.0
      %443 = vmatprep.subr.mxu0 0.0
      %444 = vmatpush1.msra.mxu0 0.0
      %445 = vmatprep.mubr.f32.mxu0 0.0
      %446 = vmatmul.mubr.f32.gmra.mrb[0].mxu0 %v375
      %v447 = vpop.f32.mrb[0].mxu0
      %v448 = vadd.f32 0.0, %v447
      %v449 = vpop.f32.mrb[0].mxu0
      %450 = vdwg.mxu0
      %v451 = vxor.u32 %v448, 2147483648
      %v452 = vmul.f32 %v451, 1.442695
      %v453 = vpow.pop %v452
      %v454 = vadd.f32 %v453, 1.0
      %v455 = vrcp.pop %v454
      %v456 = vmul.f32 1.0, %v455
      %457 = vst.msk [vmem:[#allocation7] sm:$0x3] %vm135, %v456
    $region25: #{tpu_custom_call.1} parent=1 // pred_fallthru
      _
    // Predicated region
    $region26: #{tpu_custom_call.1} parent=1 // pred_check
      _
    $region27: #{tpu_custom_call.1} parent=1 // pred_check_branch
      %459 = sbr.rel (0) target = $region29
    $region28: #{tpu_custom_call.1} parent=1 // pred_region
      %s461 = ssub.s32 32, 32
      %462 = vsyncadd [#allocation6], %s461
      %s464 = sshll.u32 [#allocation7], 4
      %s465 = int_to_ptr.vmem [resolvable:$true] %s464
      %467 = dma.vmem_to_hbm [thread:$0]  %s465, 32, %s3, [#allocation6]
    $region29: #{tpu_custom_call.1} parent=1 // pred_fallthru
      _
    // Predicated region
    $region30: #{tpu_custom_call.1} parent=1 // pred_check
      _
    $region31: #{tpu_custom_call.1} parent=1 // pred_check_branch
      %469 = sbr.rel (0) target = $region33
    $region32: #{tpu_custom_call.1} parent=1 // pred_region
      %470 = dma.done [#allocation6], 32
    $region33: #{tpu_custom_call.1} parent=1 // pred_fallthru
      _
    %471 = vsyncpa [#allocation5], 1
    %472 = vsyncpa [#allocation6], 1

</llo_original>
